<compile_context>
chip_gen: v5e
topology: v5e:2x2
jax: 0.10.0
libtpu: 0.0.40
codegen_flags: <defaults>
</compile_context>

<pallas_src>
import functools

import jax
import jax.numpy as jnp
from jax.experimental import pallas as pl
from jax.experimental.pallas import tpu as pltpu

EPS = 1e-5


def _conv_bn_relu_kernel(x_ref, w_ref, gb_ref, mask_ref, o_ref, *, k, wp, m_count):
    # x_ref:    (Cin, Lx)        padded channel-first flattened activation
    #                            (Lx = N*Hp*Wp + (k-1)*Wp + (k-1) zero tail), bf16.
    # w_ref:    (k*k*Cout, Cin)  per-tap conv weights, tap-major, bf16.
    # gb_ref:   (Cout, 2)        column 0 = BN gamma, column 1 = BN beta, f32.
    # mask_ref: (1, L)           1.0 where the dense-grid column is a real (strided)
    #                            output position, else 0.0.
    # o_ref:    (Cout, L)        lane-dense output slab over the dense (Hp, Wp) grid.
    cout, l = o_ref.shape

    x_all = x_ref[...]           # (Cin, Lx)
    w_all = w_ref[...]           # (k*k*Cout, Cin)

    # Conv as k*k accumulating matmuls over lane-shifted views:
    #   acc[o, p] = sum_{kh,kw,c} W[o, c, kh, kw] * x[c, p + kh*Wp + kw]
    # (Note: K = Cin is tiny, so the MXU is inherently under-utilized at these
    # shapes; this kernel is overhead/DMA-bound by construction.)
    acc = jnp.zeros((cout, l), jnp.float32)
    for kh in range(k):
        for kw in range(k):
            tap = kh * k + kw
            shift = kh * wp + kw
            w_tap = w_all[tap * cout:(tap + 1) * cout, :]        # (Cout, Cin)
            x_tap = x_all[:, shift:shift + l]                    # (Cin, L)
            acc = acc + jnp.dot(w_tap, x_tap,
                                preferred_element_type=jnp.float32)

    # Training-mode BatchNorm over the M valid output positions (per channel,
    # biased variance).  The conv bias is never added: it cancels against the
    # batch-mean subtraction, so omitting it is exact.
    mask = mask_ref[...]                                         # (1, L)
    inv_m = 1.0 / m_count
    mean = jnp.sum(acc * mask, axis=1, keepdims=True) * inv_m    # (Cout, 1), XLU lane reduce
    d = acc - mean
    dm = d * mask
    var = jnp.sum(dm * dm, axis=1, keepdims=True) * inv_m        # biased variance
    scale = jax.lax.rsqrt(var + EPS) * gb_ref[:, 0:1]            # folded BN affine
    out = d * scale + gb_ref[:, 1:2]
    o_ref[...] = jnp.maximum(out, 0.0)                           # ReLU; invalid cols discarded by wrapper


def basic_block_curve_forward(x, coeffs_t, params, *, kernel, stride, padding,
                              compute_dtype=jnp.bfloat16):
    """x: (N, Cin, H, W) NCHW; coeffs_t: (num_bends,); returns (N, Cout, OH, OW).

    Set compute_dtype=jnp.float32 for bit-closer parity with the f32 PyTorch module;
    bf16 is the MXU-native choice on v6e/v7x (f32 accumulation is kept either way).
    """
    n, cin, h, w = x.shape
    k = kernel

    # --- curve combination of parameters (glue, tiny) ---
    w_eff = jnp.einsum("b,boikl->oikl", coeffs_t, params["conv_w"])   # (Cout, Cin, k, k)
    g_eff = jnp.einsum("b,bo->o", coeffs_t, params["bn_w"])           # (Cout,)
    beta_eff = jnp.einsum("b,bo->o", coeffs_t, params["bn_b"])        # (Cout,)
    # params["conv_b"] intentionally unused: exactly cancelled by training-mode BN.
    cout = w_eff.shape[0]

    hp, wp = h + 2 * padding, w + 2 * padding
    oh = (hp - k) // stride + 1
    ow = (wp - k) // stride + 1
    l_dense = n * hp * wp
    max_shift = (k - 1) * wp + (k - 1)

    # Channel-first, spatially padded, flattened activation with a zero tail so the
    # in-kernel shifted slices never leave the buffer (replaces the HBM im2col).
    xp = jnp.pad(x, ((0, 0), (0, 0), (padding, padding), (padding, padding)))
    xflat = jnp.transpose(xp, (1, 0, 2, 3)).reshape(cin, l_dense)
    xflat = jnp.pad(xflat, ((0, 0), (0, max_shift))).astype(compute_dtype)

    # Per-tap weights, tap-major: rows [t*Cout:(t+1)*Cout] hold W[:, :, kh, kw], t = kh*k+kw.
    w_taps = (jnp.transpose(w_eff, (2, 3, 0, 1))
              .reshape(k * k * cout, cin).astype(compute_dtype))

    # Single (Cout, 2) operand carrying gamma / beta.
    gb = jnp.stack([g_eff, beta_eff], axis=1).astype(jnp.float32)

    # Validity mask over the dense (Hp, Wp) grid: marks the strided output positions.
    ih = jnp.arange(hp)
    iw = jnp.arange(wp)
    vh = ((ih % stride) == 0) & ((ih // stride) < oh)
    vw = ((iw % stride) == 0) & ((iw // stride) < ow)
    mask2d = (vh[:, None] & vw[None, :]).astype(jnp.float32)          # (Hp, Wp)
    mask = jnp.broadcast_to(mask2d[None], (n, hp, wp)).reshape(1, l_dense)

    m_count = float(n * oh * ow)

    # Single-block invocation: at these shapes every operand fits easily in VMEM and
    # the single-pass BN needs all output columns resident anyway.
    # TODO(synk): for large N*OH*OW (esp. v7x's 64 MiB VMEM) switch to an M-tiled
    # grid with a two-pass BN (per-channel sum/sumsq scratch, then normalize) so the
    # matmul phase pipelines and can be marked "parallel" across TensorCores.
    out_dense = pl.pallas_call(
        functools.partial(_conv_bn_relu_kernel, k=k, wp=wp, m_count=m_count),
        out_shape=jax.ShapeDtypeStruct((cout, l_dense), jnp.float32),
        grid=(1,),
        in_specs=[
            pl.BlockSpec(xflat.shape, lambda i: (0, 0)),
            pl.BlockSpec(w_taps.shape, lambda i: (0, 0)),
            pl.BlockSpec(gb.shape, lambda i: (0, 0)),
            pl.BlockSpec(mask.shape, lambda i: (0, 0)),
        ],
        out_specs=pl.BlockSpec((cout, l_dense), lambda i: (0, 0)),
        compiler_params=pltpu.CompilerParams(
            dimension_semantics=("arbitrary",)),
    )(xflat, w_taps, gb, mask)

    # (Cout, N*Hp*Wp) -> (Cout, N, Hp, Wp) -> strided valid window -> NCHW.
    out = out_dense.reshape(cout, n, hp, wp)
    out = out[:, :, 0:(oh - 1) * stride + 1:stride, 0:(ow - 1) * stride + 1:stride]
    return jnp.transpose(out, (1, 0, 2, 3))


def _reference_forward(x, coeffs_t, params, *, kernel, stride, padding):
    """Pure-JAX f32 reference matching the PyTorch module's training-mode forward."""
    w_eff = jnp.einsum("b,boikl->oikl", coeffs_t, params["conv_w"])
    b_eff = jnp.einsum("b,bo->o", coeffs_t, params["conv_b"])
    g_eff = jnp.einsum("b,bo->o", coeffs_t, params["bn_w"])
    beta_eff = jnp.einsum("b,bo->o", coeffs_t, params["bn_b"])
    y = jax.lax.conv_general_dilated(
        x, w_eff, window_strides=(stride, stride),
        padding=[(padding, padding), (padding, padding)],
        dimension_numbers=("NCHW", "OIHW", "NCHW"))
    y = y + b_eff[None, :, None, None]
    mean = jnp.mean(y, axis=(0, 2, 3), keepdims=True)
    var = jnp.mean((y - mean) ** 2, axis=(0, 2, 3), keepdims=True)
    yn = (y - mean) * jax.lax.rsqrt(var + EPS)
    yn = yn * g_eff[None, :, None, None] + beta_eff[None, :, None, None]
    return jnp.maximum(yn, 0.0)


def init_params(key, num_bends, in_planes, out_planes, kernel):
    ks = jax.random.split(key, 4)
    conv_w = 0.1 * jax.random.normal(
        ks[0], (num_bends, out_planes, in_planes, kernel, kernel), jnp.float32)
    conv_b = 0.1 * jax.random.normal(ks[1], (num_bends, out_planes), jnp.float32)
    bn_w = 1.0 + 0.1 * jax.random.normal(ks[2], (num_bends, out_planes), jnp.float32)
    bn_b = 0.1 * jax.random.normal(ks[3], (num_bends, out_planes), jnp.float32)
    return {"conv_w": conv_w, "conv_b": conv_b, "bn_w": bn_w, "bn_b": bn_b}


if __name__ == "__main__":
    # Module config: BasicBlockCurve(fix_points=(True, False, True), in_planes=4,
    #                                out_planes=8, kernel=3, bias=True, stride=1, padding=1)
    num_bends = 3
    in_planes, out_planes, kernel, stride, padding = 4, 8, 3, 1, 1

    key = jax.random.PRNGKey(0)
    k_x, k_p = jax.random.split(key)

    x = jax.random.normal(k_x, (2, in_planes, 16, 16), jnp.float32)     # NCHW input
    params = init_params(k_p, num_bends, in_planes, out_planes, kernel)

    # Bezier-curve coefficients at t = 0.25: sum to 1.
    t = 0.25
    coeffs_t = jnp.array([(1 - t) ** 2, 2 * t * (1 - t), t ** 2], jnp.float32)

    fwd = jax.jit(functools.partial(
        basic_block_curve_forward, kernel=kernel, stride=stride, padding=padding))
    out = fwd(x, coeffs_t, params)
    jax.block_until_ready(out)

    ref = _reference_forward(x, coeffs_t, params, kernel=kernel, stride=stride,
                             padding=padding)

    assert out.shape == (2, out_planes, 16, 16)
    assert bool(jnp.all(out >= 0.0))                       # ReLU
    max_err = float(jnp.max(jnp.abs(out - ref)))
    # bf16 MXU inputs vs f32 reference -> loose tolerance on O(1)-scale BN outputs.
    assert max_err < 0.1, f"max abs err vs f32 reference = {max_err}"
    print("KERNEL_OK")
</pallas_src>

<mosaic_0001>
module attributes {stable_mosaic.version = 11 : i64} {
  func.func @_conv_bn_relu_kernel(%arg0: i32, %arg1: memref<4x686xbf16, #tpu.memory_space<vmem>>, %arg2: memref<72x4xbf16, #tpu.memory_space<vmem>>, %arg3: memref<8x2xf32, #tpu.memory_space<vmem>>, %arg4: memref<1x648xf32, #tpu.memory_space<vmem>>, %arg5: memref<8x648xf32, #tpu.memory_space<vmem>>) attributes {dimension_semantics = [#tpu.dimension_semantics<arbitrary>], iteration_bounds = array<i64: 1>, scalar_prefetch = 0 : i64, scratch_operands = 0 : i64, tpu.core_type = #tpu.core_type<tc>, window_params = [{pipeline_mode = #tpu.pipeline_mode<synchronous>, transform_indices = @transform_0, window_bounds = array<i64: 4, 686>}, {pipeline_mode = #tpu.pipeline_mode<synchronous>, transform_indices = @transform_1, window_bounds = array<i64: 72, 4>}, {pipeline_mode = #tpu.pipeline_mode<synchronous>, transform_indices = @transform_2, window_bounds = array<i64: 8, 2>}, {pipeline_mode = #tpu.pipeline_mode<synchronous>, transform_indices = @transform_3, window_bounds = array<i64: 1, 648>}, {pipeline_mode = #tpu.pipeline_mode<synchronous>, transform_indices = @transform_4, window_bounds = array<i64: 8, 648>}]} {
    %c0 = arith.constant 0 : index
    %c0_0 = arith.constant 0 : index
    %0 = vector.load %arg1[%c0, %c0_0] : memref<4x686xbf16, #tpu.memory_space<vmem>>, vector<4x686xbf16>
    %c0_1 = arith.constant 0 : index
    %c0_2 = arith.constant 0 : index
    %1 = vector.load %arg2[%c0_1, %c0_2] : memref<72x4xbf16, #tpu.memory_space<vmem>>, vector<72x4xbf16>
    %cst = arith.constant 0.000000e+00 : f32
    %2 = vector.broadcast %cst : f32 to vector<8x648xf32>
    %3 = vector.extract_strided_slice %1 {offsets = [0, 0], sizes = [8, 4], strides = [1, 1]} : vector<72x4xbf16> to vector<8x4xbf16>
    %4 = vector.extract_strided_slice %0 {offsets = [0, 0], sizes = [4, 648], strides = [1, 1]} : vector<4x686xbf16> to vector<4x648xbf16>
    %cst_3 = arith.constant dense<0.000000e+00> : vector<8x648xf32>
    %5 = tpu.matmul %3, %4, %cst_3 {dimension_numbers = #tpu.dot_dimension_numbers<[1], [0], [0], [1], [0, 0, 1, 1], [], []>} : vector<8x4xbf16>, vector<4x648xbf16>, vector<8x648xf32> -> vector<8x648xf32>
    %6 = arith.addf %2, %5 : vector<8x648xf32>
    %7 = vector.extract_strided_slice %1 {offsets = [8, 0], sizes = [8, 4], strides = [1, 1]} : vector<72x4xbf16> to vector<8x4xbf16>
    %8 = vector.extract_strided_slice %0 {offsets = [0, 1], sizes = [4, 648], strides = [1, 1]} : vector<4x686xbf16> to vector<4x648xbf16>
    %cst_4 = arith.constant dense<0.000000e+00> : vector<8x648xf32>
    %9 = tpu.matmul %7, %8, %cst_4 {dimension_numbers = #tpu.dot_dimension_numbers<[1], [0], [0], [1], [0, 0, 1, 1], [], []>} : vector<8x4xbf16>, vector<4x648xbf16>, vector<8x648xf32> -> vector<8x648xf32>
    %10 = arith.addf %6, %9 : vector<8x648xf32>
    %11 = vector.extract_strided_slice %1 {offsets = [16, 0], sizes = [8, 4], strides = [1, 1]} : vector<72x4xbf16> to vector<8x4xbf16>
    %12 = vector.extract_strided_slice %0 {offsets = [0, 2], sizes = [4, 648], strides = [1, 1]} : vector<4x686xbf16> to vector<4x648xbf16>
    %cst_5 = arith.constant dense<0.000000e+00> : vector<8x648xf32>
    %13 = tpu.matmul %11, %12, %cst_5 {dimension_numbers = #tpu.dot_dimension_numbers<[1], [0], [0], [1], [0, 0, 1, 1], [], []>} : vector<8x4xbf16>, vector<4x648xbf16>, vector<8x648xf32> -> vector<8x648xf32>
    %14 = arith.addf %10, %13 : vector<8x648xf32>
    %15 = vector.extract_strided_slice %1 {offsets = [24, 0], sizes = [8, 4], strides = [1, 1]} : vector<72x4xbf16> to vector<8x4xbf16>
    %16 = vector.extract_strided_slice %0 {offsets = [0, 18], sizes = [4, 648], strides = [1, 1]} : vector<4x686xbf16> to vector<4x648xbf16>
    %cst_6 = arith.constant dense<0.000000e+00> : vector<8x648xf32>
    %17 = tpu.matmul %15, %16, %cst_6 {dimension_numbers = #tpu.dot_dimension_numbers<[1], [0], [0], [1], [0, 0, 1, 1], [], []>} : vector<8x4xbf16>, vector<4x648xbf16>, vector<8x648xf32> -> vector<8x648xf32>
    %18 = arith.addf %14, %17 : vector<8x648xf32>
    %19 = vector.extract_strided_slice %1 {offsets = [32, 0], sizes = [8, 4], strides = [1, 1]} : vector<72x4xbf16> to vector<8x4xbf16>
    %20 = vector.extract_strided_slice %0 {offsets = [0, 19], sizes = [4, 648], strides = [1, 1]} : vector<4x686xbf16> to vector<4x648xbf16>
    %cst_7 = arith.constant dense<0.000000e+00> : vector<8x648xf32>
    %21 = tpu.matmul %19, %20, %cst_7 {dimension_numbers = #tpu.dot_dimension_numbers<[1], [0], [0], [1], [0, 0, 1, 1], [], []>} : vector<8x4xbf16>, vector<4x648xbf16>, vector<8x648xf32> -> vector<8x648xf32>
    %22 = arith.addf %18, %21 : vector<8x648xf32>
    %23 = vector.extract_strided_slice %1 {offsets = [40, 0], sizes = [8, 4], strides = [1, 1]} : vector<72x4xbf16> to vector<8x4xbf16>
    %24 = vector.extract_strided_slice %0 {offsets = [0, 20], sizes = [4, 648], strides = [1, 1]} : vector<4x686xbf16> to vector<4x648xbf16>
    %cst_8 = arith.constant dense<0.000000e+00> : vector<8x648xf32>
    %25 = tpu.matmul %23, %24, %cst_8 {dimension_numbers = #tpu.dot_dimension_numbers<[1], [0], [0], [1], [0, 0, 1, 1], [], []>} : vector<8x4xbf16>, vector<4x648xbf16>, vector<8x648xf32> -> vector<8x648xf32>
    %26 = arith.addf %22, %25 : vector<8x648xf32>
    %27 = vector.extract_strided_slice %1 {offsets = [48, 0], sizes = [8, 4], strides = [1, 1]} : vector<72x4xbf16> to vector<8x4xbf16>
    %28 = vector.extract_strided_slice %0 {offsets = [0, 36], sizes = [4, 648], strides = [1, 1]} : vector<4x686xbf16> to vector<4x648xbf16>
    %cst_9 = arith.constant dense<0.000000e+00> : vector<8x648xf32>
    %29 = tpu.matmul %27, %28, %cst_9 {dimension_numbers = #tpu.dot_dimension_numbers<[1], [0], [0], [1], [0, 0, 1, 1], [], []>} : vector<8x4xbf16>, vector<4x648xbf16>, vector<8x648xf32> -> vector<8x648xf32>
    %30 = arith.addf %26, %29 : vector<8x648xf32>
    %31 = vector.extract_strided_slice %1 {offsets = [56, 0], sizes = [8, 4], strides = [1, 1]} : vector<72x4xbf16> to vector<8x4xbf16>
    %32 = vector.extract_strided_slice %0 {offsets = [0, 37], sizes = [4, 648], strides = [1, 1]} : vector<4x686xbf16> to vector<4x648xbf16>
    %cst_10 = arith.constant dense<0.000000e+00> : vector<8x648xf32>
    %33 = tpu.matmul %31, %32, %cst_10 {dimension_numbers = #tpu.dot_dimension_numbers<[1], [0], [0], [1], [0, 0, 1, 1], [], []>} : vector<8x4xbf16>, vector<4x648xbf16>, vector<8x648xf32> -> vector<8x648xf32>
    %34 = arith.addf %30, %33 : vector<8x648xf32>
    %35 = vector.extract_strided_slice %1 {offsets = [64, 0], sizes = [8, 4], strides = [1, 1]} : vector<72x4xbf16> to vector<8x4xbf16>
    %36 = vector.extract_strided_slice %0 {offsets = [0, 38], sizes = [4, 648], strides = [1, 1]} : vector<4x686xbf16> to vector<4x648xbf16>
    %cst_11 = arith.constant dense<0.000000e+00> : vector<8x648xf32>
    %37 = tpu.matmul %35, %36, %cst_11 {dimension_numbers = #tpu.dot_dimension_numbers<[1], [0], [0], [1], [0, 0, 1, 1], [], []>} : vector<8x4xbf16>, vector<4x648xbf16>, vector<8x648xf32> -> vector<8x648xf32>
    %38 = arith.addf %34, %37 : vector<8x648xf32>
    %c0_12 = arith.constant 0 : index
    %c0_13 = arith.constant 0 : index
    %39 = vector.load %arg4[%c0_12, %c0_13] : memref<1x648xf32, #tpu.memory_space<vmem>>, vector<1x648xf32>
    %40 = vector.broadcast %39 : vector<1x648xf32> to vector<8x648xf32>
    %41 = arith.mulf %38, %40 : vector<8x648xf32>
    %cst_14 = arith.constant dense<0.000000e+00> : vector<8xf32>
    %42 = vector.multi_reduction <add>, %41, %cst_14 [1] : vector<8x648xf32> to vector<8xf32>
    %43 = vector.shape_cast %42 : vector<8xf32> to vector<8x1xf32>
    %cst_15 = arith.constant 0.001953125 : f32
    %44 = vector.broadcast %cst_15 : f32 to vector<8x1xf32>
    %45 = arith.mulf %43, %44 : vector<8x1xf32>
    %46 = vector.broadcast %45 : vector<8x1xf32> to vector<8x648xf32>
    %47 = arith.subf %38, %46 : vector<8x648xf32>
    %48 = vector.broadcast %39 : vector<1x648xf32> to vector<8x648xf32>
    %49 = arith.mulf %47, %48 : vector<8x648xf32>
    %50 = arith.mulf %49, %49 : vector<8x648xf32>
    %cst_16 = arith.constant dense<0.000000e+00> : vector<8xf32>
    %51 = vector.multi_reduction <add>, %50, %cst_16 [1] : vector<8x648xf32> to vector<8xf32>
    %52 = vector.shape_cast %51 : vector<8xf32> to vector<8x1xf32>
    %cst_17 = arith.constant 0.001953125 : f32
    %53 = vector.broadcast %cst_17 : f32 to vector<8x1xf32>
    %54 = arith.mulf %52, %53 : vector<8x1xf32>
    %cst_18 = arith.constant 9.99999974E-6 : f32
    %55 = vector.broadcast %cst_18 : f32 to vector<8x1xf32>
    %56 = arith.addf %54, %55 : vector<8x1xf32>
    %57 = math.rsqrt %56 : vector<8x1xf32>
    %c0_19 = arith.constant 0 : index
    %c0_20 = arith.constant 0 : index
    %58 = vector.load %arg3[%c0_19, %c0_20] : memref<8x2xf32, #tpu.memory_space<vmem>>, vector<8x1xf32>
    %59 = arith.mulf %57, %58 : vector<8x1xf32>
    %60 = vector.broadcast %59 : vector<8x1xf32> to vector<8x648xf32>
    %61 = arith.mulf %47, %60 : vector<8x648xf32>
    %c0_21 = arith.constant 0 : index
    %c1 = arith.constant 1 : index
    %62 = vector.load %arg3[%c0_21, %c1] : memref<8x2xf32, #tpu.memory_space<vmem>>, vector<8x1xf32>
    %63 = vector.broadcast %62 : vector<8x1xf32> to vector<8x648xf32>
    %64 = arith.addf %61, %63 : vector<8x648xf32>
    %cst_22 = arith.constant 0.000000e+00 : f32
    %65 = vector.broadcast %cst_22 : f32 to vector<8x648xf32>
    %66 = arith.maximumf %64, %65 : vector<8x648xf32>
    %c0_23 = arith.constant 0 : index
    %c0_24 = arith.constant 0 : index
    %67 = vector.load %arg5[%c0_23, %c0_24] : memref<8x648xf32, #tpu.memory_space<vmem>>, vector<8x648xf32>
    tpu.vector_store %arg5[%c0_23, %c0_24], %66 {strides = array<i32>} : memref<8x648xf32, #tpu.memory_space<vmem>>, vector<8x648xf32>,
    return
  }
  func.func @transform_0(%arg0: i32) -> (i32, i32) {
    %c0_i32 = arith.constant 0 : i32
    %c0_i32_0 = arith.constant 0 : i32
    %c0_i32_1 = arith.constant 0 : i32
    return %c0_i32, %c0_i32_0 : i32, i32
  }
  func.func @transform_1(%arg0: i32) -> (i32, i32) {
    %c0_i32 = arith.constant 0 : i32
    %c0_i32_0 = arith.constant 0 : i32
    %c0_i32_1 = arith.constant 0 : i32
    return %c0_i32, %c0_i32_0 : i32, i32
  }
  func.func @transform_2(%arg0: i32) -> (i32, i32) {
    %c0_i32 = arith.constant 0 : i32
    %c0_i32_0 = arith.constant 0 : i32
    %c0_i32_1 = arith.constant 0 : i32
    return %c0_i32, %c0_i32_0 : i32, i32
  }
  func.func @transform_3(%arg0: i32) -> (i32, i32) {
    %c0_i32 = arith.constant 0 : i32
    %c0_i32_0 = arith.constant 0 : i32
    %c0_i32_1 = arith.constant 0 : i32
    return %c0_i32, %c0_i32_0 : i32, i32
  }
  func.func @transform_4(%arg0: i32) -> (i32, i32) {
    %c0_i32 = arith.constant 0 : i32
    %c0_i32_0 = arith.constant 0 : i32
    %c0_i32_1 = arith.constant 0 : i32
    return %c0_i32, %c0_i32_0 : i32, i32
  }
}

</mosaic_0001>

<llo_original>
// kernel: basic_block_curve_forward.1
$region0: #{basic_block_curve_forward.1}
  #allocation0 [shape = 'u32[]', space=smem, size = 0x4, offset = 0x4, fixed_abs, tag = 'smem constant byte address 0x4 - core index']
  #allocation1 [shape = 'u32[72,128]{1,0:T(1,128)}', space=vmem, size = 0x9000, scoped, tag = 'internal scratch']
  %s0 = inlined_call_operand.vmem [shape: bf16[4,686], index: 0, kind: input, shape index: {}]
  %s1 = inlined_call_operand.vmem [shape: bf16[72,4], index: 1, kind: input, shape index: {}]
  %s2 = inlined_call_operand.vmem [shape: f32[8,2], index: 2, kind: input, shape index: {}]
  %s3 = inlined_call_operand.vmem [shape: f32[1,648], index: 3, kind: input, shape index: {}]
  %s4 = inlined_call_operand.vmem [shape: f32[8,648], index: 4, kind: output, shape index: {}]
  %s5 = sld [smem:[#allocation0]]
  $region26: #{basic_block_curve_forward.1} parent=0
    _
  %s7 = ssub.s32 1, %s5
  %s8 = scalar_select 0, %s7, %s5
  // Predicated region
  $region2: #{basic_block_curve_forward.1} parent=0 // pred_check
    _
  $region3: #{basic_block_curve_forward.1} parent=0 // pred_check_branch
    %10 = sbr.rel (0) target = $region5
  $region4: #{basic_block_curve_forward.1} parent=0 // pred_region
    _
  $region5: #{basic_block_curve_forward.1} parent=0 // pred_fallthru
    _
  // Predicated region
  $region6: #{basic_block_curve_forward.1} parent=0 // pred_check
    _
  $region7: #{basic_block_curve_forward.1} parent=0 // pred_check_branch
    %12 = sbr.rel (0) target = $region9
  $region8: #{basic_block_curve_forward.1} parent=0 // pred_region
    _
  $region9: #{basic_block_curve_forward.1} parent=0 // pred_fallthru
    _
  // Predicated region
  $region10: #{basic_block_curve_forward.1} parent=0 // pred_check
    _
  $region11: #{basic_block_curve_forward.1} parent=0 // pred_check_branch
    %14 = sbr.rel (0) target = $region13
  $region12: #{basic_block_curve_forward.1} parent=0 // pred_region
    _
  $region13: #{basic_block_curve_forward.1} parent=0 // pred_fallthru
    _
  // Predicated region
  $region14: #{basic_block_curve_forward.1} parent=0 // pred_check
    _
  $region15: #{basic_block_curve_forward.1} parent=0 // pred_check_branch
    %16 = sbr.rel (0) target = $region17
  $region16: #{basic_block_curve_forward.1} parent=0 // pred_region
    _
  $region17: #{basic_block_curve_forward.1} parent=0 // pred_fallthru
    _
  %v18 = vld [vmem:[%s0] sm:$0xff]
  %v19 = vld [vmem:[%s0 + $0x8] sm:$0xf]
  %v20 = vld [vmem:[%s1] sm:$0xf]
  %v21 = vld [vmem:[%s1 + $0x4] sm:$0xf]
  %v22 = vld [vmem:[%s1 + $0x8] sm:$0xf]
  %v23 = vld [vmem:[%s1 + $0xc] sm:$0xf]
  %v24 = vld [vmem:[%s1 + $0x10] sm:$0xf]
  %v25 = vld [vmem:[%s1 + $0x14] sm:$0xf]
  %v26 = vld [vmem:[%s1 + $0x18] sm:$0xf]
  %v27 = vld [vmem:[%s1 + $0x1c] sm:$0xf]
  %v28 = vld [vmem:[%s1 + $0x20] sm:$0xf]
  %30 = vst [vmem:[#allocation1] ss:$4 sm:$0xff] %v18
  %s32 = scalar_lea.vmem [#allocation1], 32
  %33 = vst [vmem:[%s32] ss:$4 sm:$0xff] %v19
  %v34 = vld.sshfl [vmem:[#allocation1] sm:$0xff pattern:$0x73625140]
  %v36 = vld.sshfl [vmem:[#allocation1 + $0x8] sm:$0xff pattern:$0x73625140]
  %v38 = vld.sshfl [vmem:[#allocation1 + $0x10] sm:$0xff pattern:$0x73625140]
  %v40 = vld.sshfl [vmem:[#allocation1 + $0x18] sm:$0xff pattern:$0x73625140]
  %v42 = vld.sshfl [vmem:[#allocation1 + $0x20] sm:$0xff pattern:$0x73625140]
  %v44 = vld.sshfl [vmem:[#allocation1 + $0x28] sm:$0xff pattern:$0x73625140]
  %46 = vrot.lane.b32.xlu0 %v34, 127
  %v47 = vpop.permute.xlu0 %46
  %48 = vrot.lane.b32.xlu0 %v36, 127
  %v49 = vpop.permute.xlu0 %48
  %50 = vrot.lane.b32.xlu0 %v38, 127
  %v51 = vpop.permute.xlu0 %50
  %52 = vrot.lane.b32.xlu0 %v40, 127
  %v53 = vpop.permute.xlu0 %52
  %54 = vrot.lane.b32.xlu0 %v42, 127
  %v55 = vpop.permute.xlu0 %54
  %56 = vrot.lane.b32.xlu0 %v44, 127
  %v57 = vpop.permute.xlu0 %56
  %vm58 = vcmask 1039360
  %v59 = vsel %vm58, %v47, %v49
  %v60 = vsel %vm58, %v49, %v51
  %v61 = vsel %vm58, %v51, %v53
  %v62 = vsel %vm58, %v53, %v55
  %v63 = vsel %vm58, %v55, %v57
  %vm64 = vcmask 31744
  %v66 = vsel %vm64, %v21, 0
  %vm68 = vcmask 1041408
  %v70 = vsel %vm68, %v59, 0
  %v73 = vsel %vm68, %v60, 0
  %v76 = vsel %vm68, %v61, 0
  %v79 = vsel %vm68, %v62, 0
  %v82 = vsel %vm68, %v63, 0
  %v85 = vsel %vm68, %v57, 0
  %87 = vmatpush.bf16.msra.mxu0 0
  %88 = vmatpush.bf16.msra.mxu0 0
  %89 = vmatpush.bf16.msra.mxu0 0
  %90 = vmatpush.bf16.msra.mxu0 0
  %91 = vmatpush.bf16.msra.mxu0 0
  %92 = vmatpush.bf16.msra.mxu0 0
  %93 = vmatpush.bf16.msra.mxu0 0
  %94 = vmatpush.bf16.msra.mxu0 %v70
  %95 = vmatmul.bf16.gmra.mxu0 %v66
  %v96 = vpop.f32.mrf.mxu0
  %v97 = vadd.f32 0.0, %v96
  %v98 = vpop.f32.mrf.mxu0
  %99 = vdwg.mxu0
  %100 = vmatpush.bf16.msra.mxu0 0
  %101 = vmatpush.bf16.msra.mxu0 0
  %102 = vmatpush.bf16.msra.mxu0 0
  %103 = vmatpush.bf16.msra.mxu0 0
  %104 = vmatpush.bf16.msra.mxu0 0
  %105 = vmatpush.bf16.msra.mxu0 0
  %106 = vmatpush.bf16.msra.mxu0 0
  %107 = vmatpush.bf16.msra.mxu0 %v73
  %108 = vmatmul.bf16.gmra.mxu0 %v66
  %v109 = vpop.f32.mrf.mxu0
  %v110 = vadd.f32 0.0, %v109
  %v111 = vpop.f32.mrf.mxu0
  %112 = vdwg.mxu0
  %113 = vmatpush.bf16.msra.mxu0 0
  %114 = vmatpush.bf16.msra.mxu0 0
  %115 = vmatpush.bf16.msra.mxu0 0
  %116 = vmatpush.bf16.msra.mxu0 0
  %117 = vmatpush.bf16.msra.mxu0 0
  %118 = vmatpush.bf16.msra.mxu0 0
  %119 = vmatpush.bf16.msra.mxu0 0
  %120 = vmatpush.bf16.msra.mxu0 %v76
  %121 = vmatmul.bf16.gmra.mxu0 %v66
  %v122 = vpop.f32.mrf.mxu0
  %v123 = vadd.f32 0.0, %v122
  %v124 = vpop.f32.mrf.mxu0
  %125 = vdwg.mxu0
  %126 = vmatpush.bf16.msra.mxu0 0
  %127 = vmatpush.bf16.msra.mxu0 0
  %128 = vmatpush.bf16.msra.mxu0 0
  %129 = vmatpush.bf16.msra.mxu0 0
  %130 = vmatpush.bf16.msra.mxu0 0
  %131 = vmatpush.bf16.msra.mxu0 0
  %132 = vmatpush.bf16.msra.mxu0 0
  %133 = vmatpush.bf16.msra.mxu0 %v79
  %134 = vmatmul.bf16.gmra.mxu0 %v66
  %v135 = vpop.f32.mrf.mxu0
  %v136 = vadd.f32 0.0, %v135
  %v137 = vpop.f32.mrf.mxu0
  %138 = vdwg.mxu0
  %139 = vmatpush.bf16.msra.mxu0 0
  %140 = vmatpush.bf16.msra.mxu0 0
  %141 = vmatpush.bf16.msra.mxu0 0
  %142 = vmatpush.bf16.msra.mxu0 0
  %143 = vmatpush.bf16.msra.mxu0 0
  %144 = vmatpush.bf16.msra.mxu0 0
  %145 = vmatpush.bf16.msra.mxu0 0
  %146 = vmatpush.bf16.msra.mxu0 %v82
  %147 = vmatmul.bf16.gmra.mxu0 %v66
  %v148 = vpop.f32.mrf.mxu0
  %v149 = vadd.f32 0.0, %v148
  %v150 = vpop.f32.mrf.mxu0
  %151 = vdwg.mxu0
  %152 = vmatpush.bf16.msra.mxu0 0
  %153 = vmatpush.bf16.msra.mxu0 0
  %154 = vmatpush.bf16.msra.mxu0 0
  %155 = vmatpush.bf16.msra.mxu0 0
  %156 = vmatpush.bf16.msra.mxu0 0
  %157 = vmatpush.bf16.msra.mxu0 0
  %158 = vmatpush.bf16.msra.mxu0 0
  %159 = vmatpush.bf16.msra.mxu0 %v85
  %160 = vmatmul.bf16.gmra.mxu0 %v66
  %v161 = vpop.f32.mrf.mxu0
  %v162 = vadd.f32 0.0, %v161
  %v163 = vpop.f32.mrf.mxu0
  %164 = vdwg.mxu0
  %165 = vst [vmem:[#allocation1] ss:$4 sm:$0xff] %v18
  %s166 = scalar_lea.vmem [#allocation1], 32
  %167 = vst [vmem:[%s166] ss:$4 sm:$0xff] %v19
  %v168 = vld.sshfl [vmem:[#allocation1] sm:$0xff pattern:$0x73625140]
  %v169 = vld.sshfl [vmem:[#allocation1 + $0x8] sm:$0xff pattern:$0x73625140]
  %v170 = vld.sshfl [vmem:[#allocation1 + $0x10] sm:$0xff pattern:$0x73625140]
  %v171 = vld.sshfl [vmem:[#allocation1 + $0x18] sm:$0xff pattern:$0x73625140]
  %v172 = vld.sshfl [vmem:[#allocation1 + $0x20] sm:$0xff pattern:$0x73625140]
  %v173 = vld.sshfl [vmem:[#allocation1 + $0x28] sm:$0xff pattern:$0x73625140]
  %v175 = vsel %vm64, %v20, 0
  %v177 = vsel %vm68, %v168, 0
  %v179 = vsel %vm68, %v169, 0
  %v181 = vsel %vm68, %v170, 0
  %v183 = vsel %vm68, %v171, 0
  %v185 = vsel %vm68, %v172, 0
  %v187 = vsel %vm68, %v173, 0
  %189 = vmatpush.bf16.msra.mxu0 0
  %190 = vmatpush.bf16.msra.mxu0 0
  %191 = vmatpush.bf16.msra.mxu0 0
  %192 = vmatpush.bf16.msra.mxu0 0
  %193 = vmatpush.bf16.msra.mxu0 0
  %194 = vmatpush.bf16.msra.mxu0 0
  %195 = vmatpush.bf16.msra.mxu0 0
  %196 = vmatpush.bf16.msra.mxu0 %v177
  %197 = vmatmul.bf16.gmra.mxu0 %v175
  %v198 = vpop.f32.mrf.mxu0
  %v199 = vadd.f32 %v97, %v198
  %v200 = vpop.f32.mrf.mxu0
  %201 = vdwg.mxu0
  %202 = vmatpush.bf16.msra.mxu0 0
  %203 = vmatpush.bf16.msra.mxu0 0
  %204 = vmatpush.bf16.msra.mxu0 0
  %205 = vmatpush.bf16.msra.mxu0 0
  %206 = vmatpush.bf16.msra.mxu0 0
  %207 = vmatpush.bf16.msra.mxu0 0
  %208 = vmatpush.bf16.msra.mxu0 0
  %209 = vmatpush.bf16.msra.mxu0 %v179
  %210 = vmatmul.bf16.gmra.mxu0 %v175
  %v211 = vpop.f32.mrf.mxu0
  %v212 = vadd.f32 %v110, %v211
  %v213 = vpop.f32.mrf.mxu0
  %214 = vdwg.mxu0
  %215 = vmatpush.bf16.msra.mxu0 0
  %216 = vmatpush.bf16.msra.mxu0 0
  %217 = vmatpush.bf16.msra.mxu0 0
  %218 = vmatpush.bf16.msra.mxu0 0
  %219 = vmatpush.bf16.msra.mxu0 0
  %220 = vmatpush.bf16.msra.mxu0 0
  %221 = vmatpush.bf16.msra.mxu0 0
  %222 = vmatpush.bf16.msra.mxu0 %v181
  %223 = vmatmul.bf16.gmra.mxu0 %v175
  %v224 = vpop.f32.mrf.mxu0
  %v225 = vadd.f32 %v123, %v224
  %v226 = vpop.f32.mrf.mxu0
  %227 = vdwg.mxu0
  %228 = vmatpush.bf16.msra.mxu0 0
  %229 = vmatpush.bf16.msra.mxu0 0
  %230 = vmatpush.bf16.msra.mxu0 0
  %231 = vmatpush.bf16.msra.mxu0 0
  %232 = vmatpush.bf16.msra.mxu0 0
  %233 = vmatpush.bf16.msra.mxu0 0
  %234 = vmatpush.bf16.msra.mxu0 0
  %235 = vmatpush.bf16.msra.mxu0 %v183
  %236 = vmatmul.bf16.gmra.mxu0 %v175
  %v237 = vpop.f32.mrf.mxu0
  %v238 = vadd.f32 %v136, %v237
  %v239 = vpop.f32.mrf.mxu0
  %240 = vdwg.mxu0
  %241 = vmatpush.bf16.msra.mxu0 0
  %242 = vmatpush.bf16.msra.mxu0 0
  %243 = vmatpush.bf16.msra.mxu0 0
  %244 = vmatpush.bf16.msra.mxu0 0
  %245 = vmatpush.bf16.msra.mxu0 0
  %246 = vmatpush.bf16.msra.mxu0 0
  %247 = vmatpush.bf16.msra.mxu0 0
  %248 = vmatpush.bf16.msra.mxu0 %v185
  %249 = vmatmul.bf16.gmra.mxu0 %v175
  %v250 = vpop.f32.mrf.mxu0
  %v251 = vadd.f32 %v149, %v250
  %v252 = vpop.f32.mrf.mxu0
  %253 = vdwg.mxu0
  %254 = vmatpush.bf16.msra.mxu0 0
  %255 = vmatpush.bf16.msra.mxu0 0
  %256 = vmatpush.bf16.msra.mxu0 0
  %257 = vmatpush.bf16.msra.mxu0 0
  %258 = vmatpush.bf16.msra.mxu0 0
  %259 = vmatpush.bf16.msra.mxu0 0
  %260 = vmatpush.bf16.msra.mxu0 0
  %261 = vmatpush.bf16.msra.mxu0 %v187
  %262 = vmatmul.bf16.gmra.mxu0 %v175
  %v263 = vpop.f32.mrf.mxu0
  %v264 = vadd.f32 %v162, %v263
  %v265 = vpop.f32.mrf.mxu0
  %266 = vdwg.mxu0
  %267 = vst [vmem:[#allocation1] ss:$4 sm:$0xff] %v18
  %s268 = scalar_lea.vmem [#allocation1], 32
  %269 = vst [vmem:[%s268] ss:$4 sm:$0xff] %v19
  %v270 = vld.sshfl [vmem:[#allocation1] sm:$0xff pattern:$0x73625140]
  %v272 = vld.sshfl [vmem:[#allocation1 + $0x8] sm:$0xff pattern:$0x73625140]
  %v274 = vld.sshfl [vmem:[#allocation1 + $0x10] sm:$0xff pattern:$0x73625140]
  %v276 = vld.sshfl [vmem:[#allocation1 + $0x18] sm:$0xff pattern:$0x73625140]
  %v278 = vld.sshfl [vmem:[#allocation1 + $0x20] sm:$0xff pattern:$0x73625140]
  %v280 = vld.sshfl [vmem:[#allocation1 + $0x28] sm:$0xff pattern:$0x73625140]
  %282 = vrot.lane.b32.xlu0 %v270, 126
  %v283 = vpop.permute.xlu0 %282
  %284 = vrot.lane.b32.xlu0 %v272, 126
  %v285 = vpop.permute.xlu0 %284
  %286 = vrot.lane.b32.xlu0 %v274, 126
  %v287 = vpop.permute.xlu0 %286
  %288 = vrot.lane.b32.xlu0 %v276, 126
  %v289 = vpop.permute.xlu0 %288
  %290 = vrot.lane.b32.xlu0 %v278, 126
  %v291 = vpop.permute.xlu0 %290
  %292 = vrot.lane.b32.xlu0 %v280, 126
  %v293 = vpop.permute.xlu0 %292
  %vm294 = vcmask 1031168
  %v295 = vsel %vm294, %v283, %v285
  %v296 = vsel %vm294, %v285, %v287
  %v297 = vsel %vm294, %v287, %v289
  %v298 = vsel %vm294, %v289, %v291
  %v299 = vsel %vm294, %v291, %v293
  %v301 = vsel %vm64, %v22, 0
  %v304 = vsel %vm68, %v295, 0
  %v307 = vsel %vm68, %v296, 0
  %v310 = vsel %vm68, %v297, 0
  %v313 = vsel %vm68, %v298, 0
  %v316 = vsel %vm68, %v299, 0
  %v319 = vsel %vm68, %v293, 0
  %321 = vmatpush.bf16.msra.mxu0 0
  %322 = vmatpush.bf16.msra.mxu0 0
  %323 = vmatpush.bf16.msra.mxu0 0
  %324 = vmatpush.bf16.msra.mxu0 0
  %325 = vmatpush.bf16.msra.mxu0 0
  %326 = vmatpush.bf16.msra.mxu0 0
  %327 = vmatpush.bf16.msra.mxu0 0
  %328 = vmatpush.bf16.msra.mxu0 %v304
  %329 = vmatmul.bf16.gmra.mxu0 %v301
  %v330 = vpop.f32.mrf.mxu0
  %v331 = vadd.f32 0.0, %v330
  %v332 = vpop.f32.mrf.mxu0
  %333 = vdwg.mxu0
  %334 = vmatpush.bf16.msra.mxu0 0
  %335 = vmatpush.bf16.msra.mxu0 0
  %336 = vmatpush.bf16.msra.mxu0 0
  %337 = vmatpush.bf16.msra.mxu0 0
  %338 = vmatpush.bf16.msra.mxu0 0
  %339 = vmatpush.bf16.msra.mxu0 0
  %340 = vmatpush.bf16.msra.mxu0 0
  %341 = vmatpush.bf16.msra.mxu0 %v307
  %342 = vmatmul.bf16.gmra.mxu0 %v301
  %v343 = vpop.f32.mrf.mxu0
  %v344 = vadd.f32 0.0, %v343
  %v345 = vpop.f32.mrf.mxu0
  %346 = vdwg.mxu0
  %347 = vmatpush.bf16.msra.mxu0 0
  %348 = vmatpush.bf16.msra.mxu0 0
  %349 = vmatpush.bf16.msra.mxu0 0
  %350 = vmatpush.bf16.msra.mxu0 0
  %351 = vmatpush.bf16.msra.mxu0 0
  %352 = vmatpush.bf16.msra.mxu0 0
  %353 = vmatpush.bf16.msra.mxu0 0
  %354 = vmatpush.bf16.msra.mxu0 %v310
  %355 = vmatmul.bf16.gmra.mxu0 %v301
  %v356 = vpop.f32.mrf.mxu0
  %v357 = vadd.f32 0.0, %v356
  %v358 = vpop.f32.mrf.mxu0
  %359 = vdwg.mxu0
  %360 = vmatpush.bf16.msra.mxu0 0
  %361 = vmatpush.bf16.msra.mxu0 0
  %362 = vmatpush.bf16.msra.mxu0 0
  %363 = vmatpush.bf16.msra.mxu0 0
  %364 = vmatpush.bf16.msra.mxu0 0
  %365 = vmatpush.bf16.msra.mxu0 0
  %366 = vmatpush.bf16.msra.mxu0 0
  %367 = vmatpush.bf16.msra.mxu0 %v313
  %368 = vmatmul.bf16.gmra.mxu0 %v301
  %v369 = vpop.f32.mrf.mxu0
  %v370 = vadd.f32 0.0, %v369
  %v371 = vpop.f32.mrf.mxu0
  %372 = vdwg.mxu0
  %373 = vmatpush.bf16.msra.mxu0 0
  %374 = vmatpush.bf16.msra.mxu0 0
  %375 = vmatpush.bf16.msra.mxu0 0
  %376 = vmatpush.bf16.msra.mxu0 0
  %377 = vmatpush.bf16.msra.mxu0 0
  %378 = vmatpush.bf16.msra.mxu0 0
  %379 = vmatpush.bf16.msra.mxu0 0
  %380 = vmatpush.bf16.msra.mxu0 %v316
  %381 = vmatmul.bf16.gmra.mxu0 %v301
  %v382 = vpop.f32.mrf.mxu0
  %v383 = vadd.f32 0.0, %v382
  %v384 = vpop.f32.mrf.mxu0
  %385 = vdwg.mxu0
  %386 = vmatpush.bf16.msra.mxu0 0
  %387 = vmatpush.bf16.msra.mxu0 0
  %388 = vmatpush.bf16.msra.mxu0 0
  %389 = vmatpush.bf16.msra.mxu0 0
  %390 = vmatpush.bf16.msra.mxu0 0
  %391 = vmatpush.bf16.msra.mxu0 0
  %392 = vmatpush.bf16.msra.mxu0 0
  %393 = vmatpush.bf16.msra.mxu0 %v319
  %394 = vmatmul.bf16.gmra.mxu0 %v301
  %v395 = vpop.f32.mrf.mxu0
  %v396 = vadd.f32 0.0, %v395
  %v397 = vpop.f32.mrf.mxu0
  %398 = vdwg.mxu0
  %v399 = vadd.f32 %v199, %v331
  %v400 = vadd.f32 %v212, %v344
  %v401 = vadd.f32 %v225, %v357
  %v402 = vadd.f32 %v238, %v370
  %v403 = vadd.f32 %v251, %v383
  %v404 = vadd.f32 %v264, %v396
  %405 = vst [vmem:[#allocation1] ss:$4 sm:$0xff] %v18
  %s406 = scalar_lea.vmem [#allocation1], 32
  %407 = vst [vmem:[%s406] ss:$4 sm:$0xff] %v19
  %v408 = vld.sshfl [vmem:[#allocation1] sm:$0xff pattern:$0x73625140]
  %v410 = vld.sshfl [vmem:[#allocation1 + $0x8] sm:$0xff pattern:$0x73625140]
  %v412 = vld.sshfl [vmem:[#allocation1 + $0x10] sm:$0xff pattern:$0x73625140]
  %v414 = vld.sshfl [vmem:[#allocation1 + $0x18] sm:$0xff pattern:$0x73625140]
  %v416 = vld.sshfl [vmem:[#allocation1 + $0x20] sm:$0xff pattern:$0x73625140]
  %v418 = vld.sshfl [vmem:[#allocation1 + $0x28] sm:$0xff pattern:$0x73625140]
  %420 = vrot.lane.b32.xlu0 %v408, 110
  %v421 = vpop.permute.xlu0 %420
  %422 = vrot.lane.b32.xlu0 %v410, 110
  %v423 = vpop.permute.xlu0 %422
  %424 = vrot.lane.b32.xlu0 %v412, 110
  %v425 = vpop.permute.xlu0 %424
  %426 = vrot.lane.b32.xlu0 %v414, 110
  %v427 = vpop.permute.xlu0 %426
  %428 = vrot.lane.b32.xlu0 %v416, 110
  %v429 = vpop.permute.xlu0 %428
  %430 = vrot.lane.b32.xlu0 %v418, 110
  %v431 = vpop.permute.xlu0 %430
  %vm432 = vcmask 900096
  %v433 = vsel %vm432, %v421, %v423
  %v434 = vsel %vm432, %v423, %v425
  %v435 = vsel %vm432, %v425, %v427
  %v436 = vsel %vm432, %v427, %v429
  %v437 = vsel %vm432, %v429, %v431
  %v439 = vsel %vm64, %v23, 0
  %v442 = vsel %vm68, %v433, 0
  %v445 = vsel %vm68, %v434, 0
  %v448 = vsel %vm68, %v435, 0
  %v451 = vsel %vm68, %v436, 0
  %v454 = vsel %vm68, %v437, 0
  %v457 = vsel %vm68, %v431, 0
  %459 = vmatpush.bf16.msra.mxu0 0
  %460 = vmatpush.bf16.msra.mxu0 0
  %461 = vmatpush.bf16.msra.mxu0 0
  %462 = vmatpush.bf16.msra.mxu0 0
  %463 = vmatpush.bf16.msra.mxu0 0
  %464 = vmatpush.bf16.msra.mxu0 0
  %465 = vmatpush.bf16.msra.mxu0 0
  %466 = vmatpush.bf16.msra.mxu0 %v442
  %467 = vmatmul.bf16.gmra.mxu0 %v439
  %v468 = vpop.f32.mrf.mxu0
  %v469 = vadd.f32 0.0, %v468
  %v470 = vpop.f32.mrf.mxu0
  %471 = vdwg.mxu0
  %472 = vmatpush.bf16.msra.mxu0 0
  %473 = vmatpush.bf16.msra.mxu0 0
  %474 = vmatpush.bf16.msra.mxu0 0
  %475 = vmatpush.bf16.msra.mxu0 0
  %476 = vmatpush.bf16.msra.mxu0 0
  %477 = vmatpush.bf16.msra.mxu0 0
  %478 = vmatpush.bf16.msra.mxu0 0
  %479 = vmatpush.bf16.msra.mxu0 %v445
  %480 = vmatmul.bf16.gmra.mxu0 %v439
  %v481 = vpop.f32.mrf.mxu0
  %v482 = vadd.f32 0.0, %v481
  %v483 = vpop.f32.mrf.mxu0
  %484 = vdwg.mxu0
  %485 = vmatpush.bf16.msra.mxu0 0
  %486 = vmatpush.bf16.msra.mxu0 0
  %487 = vmatpush.bf16.msra.mxu0 0
  %488 = vmatpush.bf16.msra.mxu0 0
  %489 = vmatpush.bf16.msra.mxu0 0
  %490 = vmatpush.bf16.msra.mxu0 0
  %491 = vmatpush.bf16.msra.mxu0 0
  %492 = vmatpush.bf16.msra.mxu0 %v448
  %493 = vmatmul.bf16.gmra.mxu0 %v439
  %v494 = vpop.f32.mrf.mxu0
  %v495 = vadd.f32 0.0, %v494
  %v496 = vpop.f32.mrf.mxu0
  %497 = vdwg.mxu0
  %498 = vmatpush.bf16.msra.mxu0 0
  %499 = vmatpush.bf16.msra.mxu0 0
  %500 = vmatpush.bf16.msra.mxu0 0
  %501 = vmatpush.bf16.msra.mxu0 0
  %502 = vmatpush.bf16.msra.mxu0 0
  %503 = vmatpush.bf16.msra.mxu0 0
  %504 = vmatpush.bf16.msra.mxu0 0
  %505 = vmatpush.bf16.msra.mxu0 %v451
  %506 = vmatmul.bf16.gmra.mxu0 %v439
  %v507 = vpop.f32.mrf.mxu0
  %v508 = vadd.f32 0.0, %v507
  %v509 = vpop.f32.mrf.mxu0
  %510 = vdwg.mxu0
  %511 = vmatpush.bf16.msra.mxu0 0
  %512 = vmatpush.bf16.msra.mxu0 0
  %513 = vmatpush.bf16.msra.mxu0 0
  %514 = vmatpush.bf16.msra.mxu0 0
  %515 = vmatpush.bf16.msra.mxu0 0
  %516 = vmatpush.bf16.msra.mxu0 0
  %517 = vmatpush.bf16.msra.mxu0 0
  %518 = vmatpush.bf16.msra.mxu0 %v454
  %519 = vmatmul.bf16.gmra.mxu0 %v439
  %v520 = vpop.f32.mrf.mxu0
  %v521 = vadd.f32 0.0, %v520
  %v522 = vpop.f32.mrf.mxu0
  %523 = vdwg.mxu0
  %524 = vmatpush.bf16.msra.mxu0 0
  %525 = vmatpush.bf16.msra.mxu0 0
  %526 = vmatpush.bf16.msra.mxu0 0
  %527 = vmatpush.bf16.msra.mxu0 0
  %528 = vmatpush.bf16.msra.mxu0 0
  %529 = vmatpush.bf16.msra.mxu0 0
  %530 = vmatpush.bf16.msra.mxu0 0
  %531 = vmatpush.bf16.msra.mxu0 %v457
  %532 = vmatmul.bf16.gmra.mxu0 %v439
  %v533 = vpop.f32.mrf.mxu0
  %v534 = vadd.f32 0.0, %v533
  %v535 = vpop.f32.mrf.mxu0
  %536 = vdwg.mxu0
  %v537 = vadd.f32 %v399, %v469
  %v538 = vadd.f32 %v400, %v482
  %v539 = vadd.f32 %v401, %v495
  %v540 = vadd.f32 %v402, %v508
  %v541 = vadd.f32 %v403, %v521
  %v542 = vadd.f32 %v404, %v534
  %543 = vst [vmem:[#allocation1] ss:$4 sm:$0xff] %v18
  %s544 = scalar_lea.vmem [#allocation1], 32
  %545 = vst [vmem:[%s544] ss:$4 sm:$0xff] %v19
  %v546 = vld.sshfl [vmem:[#allocation1] sm:$0xff pattern:$0x73625140]
  %v548 = vld.sshfl [vmem:[#allocation1 + $0x8] sm:$0xff pattern:$0x73625140]
  %v550 = vld.sshfl [vmem:[#allocation1 + $0x10] sm:$0xff pattern:$0x73625140]
  %v552 = vld.sshfl [vmem:[#allocation1 + $0x18] sm:$0xff pattern:$0x73625140]
  %v554 = vld.sshfl [vmem:[#allocation1 + $0x20] sm:$0xff pattern:$0x73625140]
  %v556 = vld.sshfl [vmem:[#allocation1 + $0x28] sm:$0xff pattern:$0x73625140]
  %558 = vrot.lane.b32.xlu0 %v546, 109
  %v559 = vpop.permute.xlu0 %558
  %560 = vrot.lane.b32.xlu0 %v548, 109
  %v561 = vpop.permute.xlu0 %560
  %562 = vrot.lane.b32.xlu0 %v550, 109
  %v563 = vpop.permute.xlu0 %562
  %564 = vrot.lane.b32.xlu0 %v552, 109
  %v565 = vpop.permute.xlu0 %564
  %566 = vrot.lane.b32.xlu0 %v554, 109
  %v567 = vpop.permute.xlu0 %566
  %568 = vrot.lane.b32.xlu0 %v556, 109
  %v569 = vpop.permute.xlu0 %568
  %vm570 = vcmask 891904
  %v571 = vsel %vm570, %v559, %v561
  %v572 = vsel %vm570, %v561, %v563
  %v573 = vsel %vm570, %v563, %v565
  %v574 = vsel %vm570, %v565, %v567
  %v575 = vsel %vm570, %v567, %v569
  %v577 = vsel %vm64, %v24, 0
  %v580 = vsel %vm68, %v571, 0
  %v583 = vsel %vm68, %v572, 0
  %v586 = vsel %vm68, %v573, 0
  %v589 = vsel %vm68, %v574, 0
  %v592 = vsel %vm68, %v575, 0
  %v595 = vsel %vm68, %v569, 0
  %597 = vmatpush.bf16.msra.mxu0 0
  %598 = vmatpush.bf16.msra.mxu0 0
  %599 = vmatpush.bf16.msra.mxu0 0
  %600 = vmatpush.bf16.msra.mxu0 0
  %601 = vmatpush.bf16.msra.mxu0 0
  %602 = vmatpush.bf16.msra.mxu0 0
  %603 = vmatpush.bf16.msra.mxu0 0
  %604 = vmatpush.bf16.msra.mxu0 %v580
  %605 = vmatmul.bf16.gmra.mxu0 %v577
  %v606 = vpop.f32.mrf.mxu0
  %v607 = vadd.f32 0.0, %v606
  %v608 = vpop.f32.mrf.mxu0
  %609 = vdwg.mxu0
  %610 = vmatpush.bf16.msra.mxu0 0
  %611 = vmatpush.bf16.msra.mxu0 0
  %612 = vmatpush.bf16.msra.mxu0 0
  %613 = vmatpush.bf16.msra.mxu0 0
  %614 = vmatpush.bf16.msra.mxu0 0
  %615 = vmatpush.bf16.msra.mxu0 0
  %616 = vmatpush.bf16.msra.mxu0 0
  %617 = vmatpush.bf16.msra.mxu0 %v583
  %618 = vmatmul.bf16.gmra.mxu0 %v577
  %v619 = vpop.f32.mrf.mxu0
  %v620 = vadd.f32 0.0, %v619
  %v621 = vpop.f32.mrf.mxu0
  %622 = vdwg.mxu0
  %623 = vmatpush.bf16.msra.mxu0 0
  %624 = vmatpush.bf16.msra.mxu0 0
  %625 = vmatpush.bf16.msra.mxu0 0
  %626 = vmatpush.bf16.msra.mxu0 0
  %627 = vmatpush.bf16.msra.mxu0 0
  %628 = vmatpush.bf16.msra.mxu0 0
  %629 = vmatpush.bf16.msra.mxu0 0
  %630 = vmatpush.bf16.msra.mxu0 %v586
  %631 = vmatmul.bf16.gmra.mxu0 %v577
  %v632 = vpop.f32.mrf.mxu0
  %v633 = vadd.f32 0.0, %v632
  %v634 = vpop.f32.mrf.mxu0
  %635 = vdwg.mxu0
  %636 = vmatpush.bf16.msra.mxu0 0
  %637 = vmatpush.bf16.msra.mxu0 0
  %638 = vmatpush.bf16.msra.mxu0 0
  %639 = vmatpush.bf16.msra.mxu0 0
  %640 = vmatpush.bf16.msra.mxu0 0
  %641 = vmatpush.bf16.msra.mxu0 0
  %642 = vmatpush.bf16.msra.mxu0 0
  %643 = vmatpush.bf16.msra.mxu0 %v589
  %644 = vmatmul.bf16.gmra.mxu0 %v577
  %v645 = vpop.f32.mrf.mxu0
  %v646 = vadd.f32 0.0, %v645
  %v647 = vpop.f32.mrf.mxu0
  %648 = vdwg.mxu0
  %649 = vmatpush.bf16.msra.mxu0 0
  %650 = vmatpush.bf16.msra.mxu0 0
  %651 = vmatpush.bf16.msra.mxu0 0
  %652 = vmatpush.bf16.msra.mxu0 0
  %653 = vmatpush.bf16.msra.mxu0 0
  %654 = vmatpush.bf16.msra.mxu0 0
  %655 = vmatpush.bf16.msra.mxu0 0
  %656 = vmatpush.bf16.msra.mxu0 %v592
  %657 = vmatmul.bf16.gmra.mxu0 %v577
  %v658 = vpop.f32.mrf.mxu0
  %v659 = vadd.f32 0.0, %v658
  %v660 = vpop.f32.mrf.mxu0
  %661 = vdwg.mxu0
  %662 = vmatpush.bf16.msra.mxu0 0
  %663 = vmatpush.bf16.msra.mxu0 0
  %664 = vmatpush.bf16.msra.mxu0 0
  %665 = vmatpush.bf16.msra.mxu0 0
  %666 = vmatpush.bf16.msra.mxu0 0
  %667 = vmatpush.bf16.msra.mxu0 0
  %668 = vmatpush.bf16.msra.mxu0 0
  %669 = vmatpush.bf16.msra.mxu0 %v595
  %670 = vmatmul.bf16.gmra.mxu0 %v577
  %v671 = vpop.f32.mrf.mxu0
  %v672 = vadd.f32 0.0, %v671
  %v673 = vpop.f32.mrf.mxu0
  %674 = vdwg.mxu0
  %v675 = vadd.f32 %v537, %v607
  %v676 = vadd.f32 %v538, %v620
  %v677 = vadd.f32 %v539, %v633
  %v678 = vadd.f32 %v540, %v646
  %v679 = vadd.f32 %v541, %v659
  %v680 = vadd.f32 %v542, %v672
  %681 = vst [vmem:[#allocation1] ss:$4 sm:$0xff] %v18
  %s682 = scalar_lea.vmem [#allocation1], 32
  %683 = vst [vmem:[%s682] ss:$4 sm:$0xff] %v19
  %v684 = vld.sshfl [vmem:[#allocation1] sm:$0xff pattern:$0x73625140]
  %v686 = vld.sshfl [vmem:[#allocation1 + $0x8] sm:$0xff pattern:$0x73625140]
  %v688 = vld.sshfl [vmem:[#allocation1 + $0x10] sm:$0xff pattern:$0x73625140]
  %v690 = vld.sshfl [vmem:[#allocation1 + $0x18] sm:$0xff pattern:$0x73625140]
  %v692 = vld.sshfl [vmem:[#allocation1 + $0x20] sm:$0xff pattern:$0x73625140]
  %v694 = vld.sshfl [vmem:[#allocation1 + $0x28] sm:$0xff pattern:$0x73625140]
  %696 = vrot.lane.b32.xlu0 %v684, 108
  %v697 = vpop.permute.xlu0 %696
  %698 = vrot.lane.b32.xlu0 %v686, 108
  %v699 = vpop.permute.xlu0 %698
  %700 = vrot.lane.b32.xlu0 %v688, 108
  %v701 = vpop.permute.xlu0 %700
  %702 = vrot.lane.b32.xlu0 %v690, 108
  %v703 = vpop.permute.xlu0 %702
  %704 = vrot.lane.b32.xlu0 %v692, 108
  %v705 = vpop.permute.xlu0 %704
  %706 = vrot.lane.b32.xlu0 %v694, 108
  %v707 = vpop.permute.xlu0 %706
  %vm708 = vcmask 883712
  %v709 = vsel %vm708, %v697, %v699
  %v710 = vsel %vm708, %v699, %v701
  %v711 = vsel %vm708, %v701, %v703
  %v712 = vsel %vm708, %v703, %v705
  %v713 = vsel %vm708, %v705, %v707
  %v715 = vsel %vm64, %v25, 0
  %v718 = vsel %vm68, %v709, 0
  %v721 = vsel %vm68, %v710, 0
  %v724 = vsel %vm68, %v711, 0
  %v727 = vsel %vm68, %v712, 0
  %v730 = vsel %vm68, %v713, 0
  %v733 = vsel %vm68, %v707, 0
  %735 = vmatpush.bf16.msra.mxu0 0
  %736 = vmatpush.bf16.msra.mxu0 0
  %737 = vmatpush.bf16.msra.mxu0 0
  %738 = vmatpush.bf16.msra.mxu0 0
  %739 = vmatpush.bf16.msra.mxu0 0
  %740 = vmatpush.bf16.msra.mxu0 0
  %741 = vmatpush.bf16.msra.mxu0 0
  %742 = vmatpush.bf16.msra.mxu0 %v718
  %743 = vmatmul.bf16.gmra.mxu0 %v715
  %v744 = vpop.f32.mrf.mxu0
  %v745 = vadd.f32 0.0, %v744
  %v746 = vpop.f32.mrf.mxu0
  %747 = vdwg.mxu0
  %748 = vmatpush.bf16.msra.mxu0 0
  %749 = vmatpush.bf16.msra.mxu0 0
  %750 = vmatpush.bf16.msra.mxu0 0
  %751 = vmatpush.bf16.msra.mxu0 0
  %752 = vmatpush.bf16.msra.mxu0 0
  %753 = vmatpush.bf16.msra.mxu0 0
  %754 = vmatpush.bf16.msra.mxu0 0
  %755 = vmatpush.bf16.msra.mxu0 %v721
  %756 = vmatmul.bf16.gmra.mxu0 %v715
  %v757 = vpop.f32.mrf.mxu0
  %v758 = vadd.f32 0.0, %v757
  %v759 = vpop.f32.mrf.mxu0
  %760 = vdwg.mxu0
  %761 = vmatpush.bf16.msra.mxu0 0
  %762 = vmatpush.bf16.msra.mxu0 0
  %763 = vmatpush.bf16.msra.mxu0 0
  %764 = vmatpush.bf16.msra.mxu0 0
  %765 = vmatpush.bf16.msra.mxu0 0
  %766 = vmatpush.bf16.msra.mxu0 0
  %767 = vmatpush.bf16.msra.mxu0 0
  %768 = vmatpush.bf16.msra.mxu0 %v724
  %769 = vmatmul.bf16.gmra.mxu0 %v715
  %v770 = vpop.f32.mrf.mxu0
  %v771 = vadd.f32 0.0, %v770
  %v772 = vpop.f32.mrf.mxu0
  %773 = vdwg.mxu0
  %774 = vmatpush.bf16.msra.mxu0 0
  %775 = vmatpush.bf16.msra.mxu0 0
  %776 = vmatpush.bf16.msra.mxu0 0
  %777 = vmatpush.bf16.msra.mxu0 0
  %778 = vmatpush.bf16.msra.mxu0 0
  %779 = vmatpush.bf16.msra.mxu0 0
  %780 = vmatpush.bf16.msra.mxu0 0
  %781 = vmatpush.bf16.msra.mxu0 %v727
  %782 = vmatmul.bf16.gmra.mxu0 %v715
  %v783 = vpop.f32.mrf.mxu0
  %v784 = vadd.f32 0.0, %v783
  %v785 = vpop.f32.mrf.mxu0
  %786 = vdwg.mxu0
  %787 = vmatpush.bf16.msra.mxu0 0
  %788 = vmatpush.bf16.msra.mxu0 0
  %789 = vmatpush.bf16.msra.mxu0 0
  %790 = vmatpush.bf16.msra.mxu0 0
  %791 = vmatpush.bf16.msra.mxu0 0
  %792 = vmatpush.bf16.msra.mxu0 0
  %793 = vmatpush.bf16.msra.mxu0 0
  %794 = vmatpush.bf16.msra.mxu0 %v730
  %795 = vmatmul.bf16.gmra.mxu0 %v715
  %v796 = vpop.f32.mrf.mxu0
  %v797 = vadd.f32 0.0, %v796
  %v798 = vpop.f32.mrf.mxu0
  %799 = vdwg.mxu0
  %800 = vmatpush.bf16.msra.mxu0 0
  %801 = vmatpush.bf16.msra.mxu0 0
  %802 = vmatpush.bf16.msra.mxu0 0
  %803 = vmatpush.bf16.msra.mxu0 0
  %804 = vmatpush.bf16.msra.mxu0 0
  %805 = vmatpush.bf16.msra.mxu0 0
  %806 = vmatpush.bf16.msra.mxu0 0
  %807 = vmatpush.bf16.msra.mxu0 %v733
  %808 = vmatmul.bf16.gmra.mxu0 %v715
  %v809 = vpop.f32.mrf.mxu0
  %v810 = vadd.f32 0.0, %v809
  %v811 = vpop.f32.mrf.mxu0
  %812 = vdwg.mxu0
  %v813 = vadd.f32 %v675, %v745
  %v814 = vadd.f32 %v676, %v758
  %v815 = vadd.f32 %v677, %v771
  %v816 = vadd.f32 %v678, %v784
  %v817 = vadd.f32 %v679, %v797
  %v818 = vadd.f32 %v680, %v810
  %819 = vst [vmem:[#allocation1] ss:$4 sm:$0xff] %v18
  %s820 = scalar_lea.vmem [#allocation1], 32
  %821 = vst [vmem:[%s820] ss:$4 sm:$0xff] %v19
  %v822 = vld.sshfl [vmem:[#allocation1] sm:$0xff pattern:$0x73625140]
  %v824 = vld.sshfl [vmem:[#allocation1 + $0x8] sm:$0xff pattern:$0x73625140]
  %v826 = vld.sshfl [vmem:[#allocation1 + $0x10] sm:$0xff pattern:$0x73625140]
  %v828 = vld.sshfl [vmem:[#allocation1 + $0x18] sm:$0xff pattern:$0x73625140]
  %v830 = vld.sshfl [vmem:[#allocation1 + $0x20] sm:$0xff pattern:$0x73625140]
  %v832 = vld.sshfl [vmem:[#allocation1 + $0x28] sm:$0xff pattern:$0x73625140]
  %834 = vrot.lane.b32.xlu0 %v822, 92
  %v835 = vpop.permute.xlu0 %834
  %836 = vrot.lane.b32.xlu0 %v824, 92
  %v837 = vpop.permute.xlu0 %836
  %838 = vrot.lane.b32.xlu0 %v826, 92
  %v839 = vpop.permute.xlu0 %838
  %840 = vrot.lane.b32.xlu0 %v828, 92
  %v841 = vpop.permute.xlu0 %840
  %842 = vrot.lane.b32.xlu0 %v830, 92
  %v843 = vpop.permute.xlu0 %842
  %844 = vrot.lane.b32.xlu0 %v832, 92
  %v845 = vpop.permute.xlu0 %844
  %vm846 = vcmask 752640
  %v847 = vsel %vm846, %v835, %v837
  %v848 = vsel %vm846, %v837, %v839
  %v849 = vsel %vm846, %v839, %v841
  %v850 = vsel %vm846, %v841, %v843
  %v851 = vsel %vm846, %v843, %v845
  %v853 = vsel %vm64, %v26, 0
  %v856 = vsel %vm68, %v847, 0
  %v859 = vsel %vm68, %v848, 0
  %v862 = vsel %vm68, %v849, 0
  %v865 = vsel %vm68, %v850, 0
  %v868 = vsel %vm68, %v851, 0
  %v871 = vsel %vm68, %v845, 0
  %873 = vmatpush.bf16.msra.mxu0 0
  %874 = vmatpush.bf16.msra.mxu0 0
  %875 = vmatpush.bf16.msra.mxu0 0
  %876 = vmatpush.bf16.msra.mxu0 0
  %877 = vmatpush.bf16.msra.mxu0 0
  %878 = vmatpush.bf16.msra.mxu0 0
  %879 = vmatpush.bf16.msra.mxu0 0
  %880 = vmatpush.bf16.msra.mxu0 %v856
  %881 = vmatmul.bf16.gmra.mxu0 %v853
  %v882 = vpop.f32.mrf.mxu0
  %v883 = vadd.f32 0.0, %v882
  %v884 = vpop.f32.mrf.mxu0
  %885 = vdwg.mxu0
  %886 = vmatpush.bf16.msra.mxu0 0
  %887 = vmatpush.bf16.msra.mxu0 0
  %888 = vmatpush.bf16.msra.mxu0 0
  %889 = vmatpush.bf16.msra.mxu0 0
  %890 = vmatpush.bf16.msra.mxu0 0
  %891 = vmatpush.bf16.msra.mxu0 0
  %892 = vmatpush.bf16.msra.mxu0 0
  %893 = vmatpush.bf16.msra.mxu0 %v859
  %894 = vmatmul.bf16.gmra.mxu0 %v853
  %v895 = vpop.f32.mrf.mxu0
  %v896 = vadd.f32 0.0, %v895
  %v897 = vpop.f32.mrf.mxu0
  %898 = vdwg.mxu0
  %899 = vmatpush.bf16.msra.mxu0 0
  %900 = vmatpush.bf16.msra.mxu0 0
  %901 = vmatpush.bf16.msra.mxu0 0
  %902 = vmatpush.bf16.msra.mxu0 0
  %903 = vmatpush.bf16.msra.mxu0 0
  %904 = vmatpush.bf16.msra.mxu0 0
  %905 = vmatpush.bf16.msra.mxu0 0
  %906 = vmatpush.bf16.msra.mxu0 %v862
  %907 = vmatmul.bf16.gmra.mxu0 %v853
  %v908 = vpop.f32.mrf.mxu0
  %v909 = vadd.f32 0.0, %v908
  %v910 = vpop.f32.mrf.mxu0
  %911 = vdwg.mxu0
  %912 = vmatpush.bf16.msra.mxu0 0
  %913 = vmatpush.bf16.msra.mxu0 0
  %914 = vmatpush.bf16.msra.mxu0 0
  %915 = vmatpush.bf16.msra.mxu0 0
  %916 = vmatpush.bf16.msra.mxu0 0
  %917 = vmatpush.bf16.msra.mxu0 0
  %918 = vmatpush.bf16.msra.mxu0 0
  %919 = vmatpush.bf16.msra.mxu0 %v865
  %920 = vmatmul.bf16.gmra.mxu0 %v853
  %v921 = vpop.f32.mrf.mxu0
  %v922 = vadd.f32 0.0, %v921
  %v923 = vpop.f32.mrf.mxu0
  %924 = vdwg.mxu0
  %925 = vmatpush.bf16.msra.mxu0 0
  %926 = vmatpush.bf16.msra.mxu0 0
  %927 = vmatpush.bf16.msra.mxu0 0
  %928 = vmatpush.bf16.msra.mxu0 0
  %929 = vmatpush.bf16.msra.mxu0 0
  %930 = vmatpush.bf16.msra.mxu0 0
  %931 = vmatpush.bf16.msra.mxu0 0
  %932 = vmatpush.bf16.msra.mxu0 %v868
  %933 = vmatmul.bf16.gmra.mxu0 %v853
  %v934 = vpop.f32.mrf.mxu0
  %v935 = vadd.f32 0.0, %v934
  %v936 = vpop.f32.mrf.mxu0
  %937 = vdwg.mxu0
  %938 = vmatpush.bf16.msra.mxu0 0
  %939 = vmatpush.bf16.msra.mxu0 0
  %940 = vmatpush.bf16.msra.mxu0 0
  %941 = vmatpush.bf16.msra.mxu0 0
  %942 = vmatpush.bf16.msra.mxu0 0
  %943 = vmatpush.bf16.msra.mxu0 0
  %944 = vmatpush.bf16.msra.mxu0 0
  %945 = vmatpush.bf16.msra.mxu0 %v871
  %946 = vmatmul.bf16.gmra.mxu0 %v853
  %v947 = vpop.f32.mrf.mxu0
  %v948 = vadd.f32 0.0, %v947
  %v949 = vpop.f32.mrf.mxu0
  %950 = vdwg.mxu0
  %v951 = vadd.f32 %v813, %v883
  %v952 = vadd.f32 %v814, %v896
  %v953 = vadd.f32 %v815, %v909
  %v954 = vadd.f32 %v816, %v922
  %v955 = vadd.f32 %v817, %v935
  %v956 = vadd.f32 %v818, %v948
  %957 = vst [vmem:[#allocation1] ss:$4 sm:$0xff] %v18
  %s958 = scalar_lea.vmem [#allocation1], 32
  %959 = vst [vmem:[%s958] ss:$4 sm:$0xff] %v19
  %v960 = vld.sshfl [vmem:[#allocation1] sm:$0xff pattern:$0x73625140]
  %v962 = vld.sshfl [vmem:[#allocation1 + $0x8] sm:$0xff pattern:$0x73625140]
  %v964 = vld.sshfl [vmem:[#allocation1 + $0x10] sm:$0xff pattern:$0x73625140]
  %v966 = vld.sshfl [vmem:[#allocation1 + $0x18] sm:$0xff pattern:$0x73625140]
  %v968 = vld.sshfl [vmem:[#allocation1 + $0x20] sm:$0xff pattern:$0x73625140]
  %v970 = vld.sshfl [vmem:[#allocation1 + $0x28] sm:$0xff pattern:$0x73625140]
  %972 = vrot.lane.b32.xlu0 %v960, 91
  %v973 = vpop.permute.xlu0 %972
  %974 = vrot.lane.b32.xlu0 %v962, 91
  %v975 = vpop.permute.xlu0 %974
  %976 = vrot.lane.b32.xlu0 %v964, 91
  %v977 = vpop.permute.xlu0 %976
  %978 = vrot.lane.b32.xlu0 %v966, 91
  %v979 = vpop.permute.xlu0 %978
  %980 = vrot.lane.b32.xlu0 %v968, 91
  %v981 = vpop.permute.xlu0 %980
  %982 = vrot.lane.b32.xlu0 %v970, 91
  %v983 = vpop.permute.xlu0 %982
  %vm984 = vcmask 744448
  %v985 = vsel %vm984, %v973, %v975
  %v986 = vsel %vm984, %v975, %v977
  %v987 = vsel %vm984, %v977, %v979
  %v988 = vsel %vm984, %v979, %v981
  %v989 = vsel %vm984, %v981, %v983
  %v991 = vsel %vm64, %v27, 0
  %v994 = vsel %vm68, %v985, 0
  %v997 = vsel %vm68, %v986, 0
  %v1000 = vsel %vm68, %v987, 0
  %v1003 = vsel %vm68, %v988, 0
  %v1006 = vsel %vm68, %v989, 0
  %v1009 = vsel %vm68, %v983, 0
  %1011 = vmatpush.bf16.msra.mxu0 0
  %1012 = vmatpush.bf16.msra.mxu0 0
  %1013 = vmatpush.bf16.msra.mxu0 0
  %1014 = vmatpush.bf16.msra.mxu0 0
  %1015 = vmatpush.bf16.msra.mxu0 0
  %1016 = vmatpush.bf16.msra.mxu0 0
  %1017 = vmatpush.bf16.msra.mxu0 0
  %1018 = vmatpush.bf16.msra.mxu0 %v994
  %1019 = vmatmul.bf16.gmra.mxu0 %v991
  %v1020 = vpop.f32.mrf.mxu0
  %v1021 = vadd.f32 0.0, %v1020
  %v1022 = vpop.f32.mrf.mxu0
  %1023 = vdwg.mxu0
  %1024 = vmatpush.bf16.msra.mxu0 0
  %1025 = vmatpush.bf16.msra.mxu0 0
  %1026 = vmatpush.bf16.msra.mxu0 0
  %1027 = vmatpush.bf16.msra.mxu0 0
  %1028 = vmatpush.bf16.msra.mxu0 0
  %1029 = vmatpush.bf16.msra.mxu0 0
  %1030 = vmatpush.bf16.msra.mxu0 0
  %1031 = vmatpush.bf16.msra.mxu0 %v997
  %1032 = vmatmul.bf16.gmra.mxu0 %v991
  %v1033 = vpop.f32.mrf.mxu0
  %v1034 = vadd.f32 0.0, %v1033
  %v1035 = vpop.f32.mrf.mxu0
  %1036 = vdwg.mxu0
  %1037 = vmatpush.bf16.msra.mxu0 0
  %1038 = vmatpush.bf16.msra.mxu0 0
  %1039 = vmatpush.bf16.msra.mxu0 0
  %1040 = vmatpush.bf16.msra.mxu0 0
  %1041 = vmatpush.bf16.msra.mxu0 0
  %1042 = vmatpush.bf16.msra.mxu0 0
  %1043 = vmatpush.bf16.msra.mxu0 0
  %1044 = vmatpush.bf16.msra.mxu0 %v1000
  %1045 = vmatmul.bf16.gmra.mxu0 %v991
  %v1046 = vpop.f32.mrf.mxu0
  %v1047 = vadd.f32 0.0, %v1046
  %v1048 = vpop.f32.mrf.mxu0
  %1049 = vdwg.mxu0
  %1050 = vmatpush.bf16.msra.mxu0 0
  %1051 = vmatpush.bf16.msra.mxu0 0
  %1052 = vmatpush.bf16.msra.mxu0 0
  %1053 = vmatpush.bf16.msra.mxu0 0
  %1054 = vmatpush.bf16.msra.mxu0 0
  %1055 = vmatpush.bf16.msra.mxu0 0
  %1056 = vmatpush.bf16.msra.mxu0 0
  %1057 = vmatpush.bf16.msra.mxu0 %v1003
  %1058 = vmatmul.bf16.gmra.mxu0 %v991
  %v1059 = vpop.f32.mrf.mxu0
  %v1060 = vadd.f32 0.0, %v1059
  %v1061 = vpop.f32.mrf.mxu0
  %1062 = vdwg.mxu0
  %1063 = vmatpush.bf16.msra.mxu0 0
  %1064 = vmatpush.bf16.msra.mxu0 0
  %1065 = vmatpush.bf16.msra.mxu0 0
  %1066 = vmatpush.bf16.msra.mxu0 0
  %1067 = vmatpush.bf16.msra.mxu0 0
  %1068 = vmatpush.bf16.msra.mxu0 0
  %1069 = vmatpush.bf16.msra.mxu0 0
  %1070 = vmatpush.bf16.msra.mxu0 %v1006
  %1071 = vmatmul.bf16.gmra.mxu0 %v991
  %v1072 = vpop.f32.mrf.mxu0
  %v1073 = vadd.f32 0.0, %v1072
  %v1074 = vpop.f32.mrf.mxu0
  %1075 = vdwg.mxu0
  %1076 = vmatpush.bf16.msra.mxu0 0
  %1077 = vmatpush.bf16.msra.mxu0 0
  %1078 = vmatpush.bf16.msra.mxu0 0
  %1079 = vmatpush.bf16.msra.mxu0 0
  %1080 = vmatpush.bf16.msra.mxu0 0
  %1081 = vmatpush.bf16.msra.mxu0 0
  %1082 = vmatpush.bf16.msra.mxu0 0
  %1083 = vmatpush.bf16.msra.mxu0 %v1009
  %1084 = vmatmul.bf16.gmra.mxu0 %v991
  %v1085 = vpop.f32.mrf.mxu0
  %v1086 = vadd.f32 0.0, %v1085
  %v1087 = vpop.f32.mrf.mxu0
  %1088 = vdwg.mxu0
  %v1089 = vadd.f32 %v951, %v1021
  %v1090 = vadd.f32 %v952, %v1034
  %v1091 = vadd.f32 %v953, %v1047
  %v1092 = vadd.f32 %v954, %v1060
  %v1093 = vadd.f32 %v955, %v1073
  %v1094 = vadd.f32 %v956, %v1086
  %1095 = vst [vmem:[#allocation1] ss:$4 sm:$0xff] %v18
  %s1096 = scalar_lea.vmem [#allocation1], 32
  %1097 = vst [vmem:[%s1096] ss:$4 sm:$0xff] %v19
  %v1098 = vld.sshfl [vmem:[#allocation1] sm:$0xff pattern:$0x73625140]
  %v1100 = vld.sshfl [vmem:[#allocation1 + $0x8] sm:$0xff pattern:$0x73625140]
  %v1102 = vld.sshfl [vmem:[#allocation1 + $0x10] sm:$0xff pattern:$0x73625140]
  %v1104 = vld.sshfl [vmem:[#allocation1 + $0x18] sm:$0xff pattern:$0x73625140]
  %v1106 = vld.sshfl [vmem:[#allocation1 + $0x20] sm:$0xff pattern:$0x73625140]
  %v1108 = vld.sshfl [vmem:[#allocation1 + $0x28] sm:$0xff pattern:$0x73625140]
  %1110 = vrot.lane.b32.xlu0 %v1098, 90
  %v1111 = vpop.permute.xlu0 %1110
  %1112 = vrot.lane.b32.xlu0 %v1100, 90
  %v1113 = vpop.permute.xlu0 %1112
  %1114 = vrot.lane.b32.xlu0 %v1102, 90
  %v1115 = vpop.permute.xlu0 %1114
  %1116 = vrot.lane.b32.xlu0 %v1104, 90
  %v1117 = vpop.permute.xlu0 %1116
  %1118 = vrot.lane.b32.xlu0 %v1106, 90
  %v1119 = vpop.permute.xlu0 %1118
  %1120 = vrot.lane.b32.xlu0 %v1108, 90
  %v1121 = vpop.permute.xlu0 %1120
  %vm1122 = vcmask 736256
  %v1123 = vsel %vm1122, %v1111, %v1113
  %v1124 = vsel %vm1122, %v1113, %v1115
  %v1125 = vsel %vm1122, %v1115, %v1117
  %v1126 = vsel %vm1122, %v1117, %v1119
  %v1127 = vsel %vm1122, %v1119, %v1121
  %v1129 = vsel %vm64, %v28, 0
  %v1132 = vsel %vm68, %v1123, 0
  %v1135 = vsel %vm68, %v1124, 0
  %v1138 = vsel %vm68, %v1125, 0
  %v1141 = vsel %vm68, %v1126, 0
  %v1144 = vsel %vm68, %v1127, 0
  %v1147 = vsel %vm68, %v1121, 0
  %1149 = vmatpush.bf16.msra.mxu0 0
  %1150 = vmatpush.bf16.msra.mxu0 0
  %1151 = vmatpush.bf16.msra.mxu0 0
  %1152 = vmatpush.bf16.msra.mxu0 0
  %1153 = vmatpush.bf16.msra.mxu0 0
  %1154 = vmatpush.bf16.msra.mxu0 0
  %1155 = vmatpush.bf16.msra.mxu0 0
  %1156 = vmatpush.bf16.msra.mxu0 %v1132
  %1157 = vmatmul.bf16.gmra.mxu0 %v1129
  %v1158 = vpop.f32.mrf.mxu0
  %v1159 = vadd.f32 0.0, %v1158
  %v1160 = vpop.f32.mrf.mxu0
  %1161 = vdwg.mxu0
  %1162 = vmatpush.bf16.msra.mxu0 0
  %1163 = vmatpush.bf16.msra.mxu0 0
  %1164 = vmatpush.bf16.msra.mxu0 0
  %1165 = vmatpush.bf16.msra.mxu0 0
  %1166 = vmatpush.bf16.msra.mxu0 0
  %1167 = vmatpush.bf16.msra.mxu0 0
  %1168 = vmatpush.bf16.msra.mxu0 0
  %1169 = vmatpush.bf16.msra.mxu0 %v1135
  %1170 = vmatmul.bf16.gmra.mxu0 %v1129
  %v1171 = vpop.f32.mrf.mxu0
  %v1172 = vadd.f32 0.0, %v1171
  %v1173 = vpop.f32.mrf.mxu0
  %1174 = vdwg.mxu0
  %1175 = vmatpush.bf16.msra.mxu0 0
  %1176 = vmatpush.bf16.msra.mxu0 0
  %1177 = vmatpush.bf16.msra.mxu0 0
  %1178 = vmatpush.bf16.msra.mxu0 0
  %1179 = vmatpush.bf16.msra.mxu0 0
  %1180 = vmatpush.bf16.msra.mxu0 0
  %1181 = vmatpush.bf16.msra.mxu0 0
  %1182 = vmatpush.bf16.msra.mxu0 %v1138
  %1183 = vmatmul.bf16.gmra.mxu0 %v1129
  %v1184 = vpop.f32.mrf.mxu0
  %v1185 = vadd.f32 0.0, %v1184
  %v1186 = vpop.f32.mrf.mxu0
  %1187 = vdwg.mxu0
  %1188 = vmatpush.bf16.msra.mxu0 0
  %1189 = vmatpush.bf16.msra.mxu0 0
  %1190 = vmatpush.bf16.msra.mxu0 0
  %1191 = vmatpush.bf16.msra.mxu0 0
  %1192 = vmatpush.bf16.msra.mxu0 0
  %1193 = vmatpush.bf16.msra.mxu0 0
  %1194 = vmatpush.bf16.msra.mxu0 0
  %1195 = vmatpush.bf16.msra.mxu0 %v1141
  %1196 = vmatmul.bf16.gmra.mxu0 %v1129
  %v1197 = vpop.f32.mrf.mxu0
  %v1198 = vadd.f32 0.0, %v1197
  %v1199 = vpop.f32.mrf.mxu0
  %1200 = vdwg.mxu0
  %1201 = vmatpush.bf16.msra.mxu0 0
  %1202 = vmatpush.bf16.msra.mxu0 0
  %1203 = vmatpush.bf16.msra.mxu0 0
  %1204 = vmatpush.bf16.msra.mxu0 0
  %1205 = vmatpush.bf16.msra.mxu0 0
  %1206 = vmatpush.bf16.msra.mxu0 0
  %1207 = vmatpush.bf16.msra.mxu0 0
  %1208 = vmatpush.bf16.msra.mxu0 %v1144
  %1209 = vmatmul.bf16.gmra.mxu0 %v1129
  %v1210 = vpop.f32.mrf.mxu0
  %v1211 = vadd.f32 0.0, %v1210
  %v1212 = vpop.f32.mrf.mxu0
  %1213 = vdwg.mxu0
  %1214 = vmatpush.bf16.msra.mxu0 0
  %1215 = vmatpush.bf16.msra.mxu0 0
  %1216 = vmatpush.bf16.msra.mxu0 0
  %1217 = vmatpush.bf16.msra.mxu0 0
  %1218 = vmatpush.bf16.msra.mxu0 0
  %1219 = vmatpush.bf16.msra.mxu0 0
  %1220 = vmatpush.bf16.msra.mxu0 0
  %1221 = vmatpush.bf16.msra.mxu0 %v1147
  %1222 = vmatmul.bf16.gmra.mxu0 %v1129
  %v1223 = vpop.f32.mrf.mxu0
  %v1224 = vadd.f32 0.0, %v1223
  %v1225 = vpop.f32.mrf.mxu0
  %1226 = vdwg.mxu0
  %v1227 = vadd.f32 %v1089, %v1159
  %v1228 = vadd.f32 %v1090, %v1172
  %v1229 = vadd.f32 %v1091, %v1185
  %v1230 = vadd.f32 %v1092, %v1198
  %v1231 = vadd.f32 %v1093, %v1211
  %v1232 = vadd.f32 %v1094, %v1224
  %v1233 = vld [vmem:[%s3] sm:$0x3f]
  %v1235 = vperm.slane %v1233, 0
  %v1236 = vperm.slane %v1233, 1
  %v1237 = vperm.slane %v1233, 2
  %v1238 = vperm.slane %v1233, 3
  %v1239 = vperm.slane %v1233, 4
  %v1240 = vperm.slane %v1233, 5
  %v1247 = vmul.f32 %v1227, %v1235
  %v1248 = vmul.f32 %v1228, %v1236
  %v1249 = vmul.f32 %v1229, %v1237
  %v1250 = vmul.f32 %v1230, %v1238
  %v1251 = vmul.f32 %v1231, %v1239
  %v1252 = vmul.f32 %v1232, %v1240
  %v1253 = vadd.f32 %v1247, %v1248
  %v1254 = vadd.f32 %v1253, %v1249
  %v1255 = vadd.f32 %v1254, %v1250
  %v1256 = vadd.f32 %v1255, %v1251
  %vm1257 = vcmask 64512
  %v1258 = vsel %vm1257, %v1252, 0.0
  %v1259 = vadd.f32 %v1256, %v1258
  %1260 = vadd.xlane.f32.xlu0 %v1259
  %v1261 = vpop.xlane.xlu0 %1260
  %v1262 = vmul.f32 %v1261, 0.001953125
  %v1263 = vsub.f32 %v1227, %v1262
  %v1264 = vsub.f32 %v1228, %v1262
  %v1265 = vsub.f32 %v1229, %v1262
  %v1266 = vsub.f32 %v1230, %v1262
  %v1267 = vsub.f32 %v1231, %v1262
  %v1268 = vsub.f32 %v1232, %v1262
  %v1269 = vmul.f32 %v1263, %v1235
  %v1270 = vmul.f32 %v1264, %v1236
  %v1271 = vmul.f32 %v1265, %v1237
  %v1272 = vmul.f32 %v1266, %v1238
  %v1273 = vmul.f32 %v1267, %v1239
  %v1274 = vmul.f32 %v1268, %v1240
  %v1275 = vmul.f32 %v1269, %v1269
  %v1276 = vmul.f32 %v1270, %v1270
  %v1277 = vmul.f32 %v1271, %v1271
  %v1278 = vmul.f32 %v1272, %v1272
  %v1279 = vmul.f32 %v1273, %v1273
  %v1280 = vmul.f32 %v1274, %v1274
  %v1281 = vadd.f32 %v1275, %v1276
  %v1282 = vadd.f32 %v1281, %v1277
  %v1283 = vadd.f32 %v1282, %v1278
  %v1284 = vadd.f32 %v1283, %v1279
  %v1285 = vsel %vm1257, %v1280, 0.0
  %v1286 = vadd.f32 %v1284, %v1285
  %1287 = vadd.xlane.f32.xlu0 %v1286
  %v1288 = vpop.xlane.xlu0 %1287
  %v1289 = vmul.f32 %v1288, 0.001953125
  %v1290 = vadd.f32 %v1289, 1e-05
  %v1291 = vrsqrt.pop %v1290
  %v1292 = vmul.f32 %v1291, %v1290
  %v1293 = vmul.f32 %v1292, %v1291
  %v1294 = vmul.f32 0.5, %v1293
  %v1295 = vsub.f32 1.5, %v1294
  %v1296 = vmul.f32 %v1291, %v1295
  %vm1297 = vweird.f32 %v1290
  %vm1298 = vweird.f32 %v1291
  %vm1299 = vmor %vm1297, %vm1298
  %v1300 = vsel %vm1299, %v1291, %v1296
  %v1301 = vld [vmem:[%s2] sm:$0xff]
  %v1302 = vmul.f32 %v1300, %v1301
  %1304 = vset.pattern.permute.xlu0 0
  %1305 = vperm.xlu0 %1304, %v1302
  %v1306 = vpop.permute.xlu0 %1305
  %v1308 = vmul.f32 %v1263, %v1306
  %v1309 = vmul.f32 %v1264, %v1306
  %v1310 = vmul.f32 %v1265, %v1306
  %v1311 = vmul.f32 %v1266, %v1306
  %v1312 = vmul.f32 %v1267, %v1306
  %v1313 = vmul.f32 %v1268, %v1306
  %1315 = vset.pattern.permute.xlu0 1
  %1316 = vperm.xlu0 %1315, %v1301
  %v1317 = vpop.permute.xlu0 %1316
  %v1319 = vadd.f32 %v1308, %v1317
  %v1320 = vadd.f32 %v1309, %v1317
  %v1321 = vadd.f32 %v1310, %v1317
  %v1322 = vadd.f32 %v1311, %v1317
  %v1323 = vadd.f32 %v1312, %v1317
  %v1324 = vadd.f32 %v1313, %v1317
  %v1325 = vmax.f32 %v1319, 0.0
  %v1326 = vmax.f32 %v1320, 0.0
  %v1327 = vmax.f32 %v1321, 0.0
  %v1328 = vmax.f32 %v1322, 0.0
  %v1329 = vmax.f32 %v1323, 0.0
  %v1330 = vmax.f32 %v1324, 0.0
  %1331 = vst [vmem:[%s4] sm:$0xff] %v1325
  %1332 = vst [vmem:[%s4 + $0x8] sm:$0xff] %v1326
  %1333 = vst [vmem:[%s4 + $0x10] sm:$0xff] %v1327
  %1334 = vst [vmem:[%s4 + $0x18] sm:$0xff] %v1328
  %1335 = vst [vmem:[%s4 + $0x20] sm:$0xff] %v1329
  %1336 = vst.msk [vmem:[%s4 + $0x28] sm:$0xff] %vm1257, %v1330
  // Predicated region
  $region18: #{basic_block_curve_forward.1} parent=0 // pred_check
    _
  $region19: #{basic_block_curve_forward.1} parent=0 // pred_check_branch
    %1338 = sbr.rel (0) target = $region21
  $region20: #{basic_block_curve_forward.1} parent=0 // pred_region
    _
  $region21: #{basic_block_curve_forward.1} parent=0 // pred_fallthru
    _
  // Predicated region
  $region22: #{basic_block_curve_forward.1} parent=0 // pred_check
    _
  $region23: #{basic_block_curve_forward.1} parent=0 // pred_check_branch
    %1340 = sbr.rel (0) target = $region25
  $region24: #{basic_block_curve_forward.1} parent=0 // pred_region
    _
  $region25: #{basic_block_curve_forward.1} parent=0 // pred_fallthru
    _

</llo_original>
